<compile_context>
chip_gen: v7x
topology: tpu7x:2x2x1
jax: 0.10.0
libtpu: 0.0.40
codegen_flags: <defaults>
</compile_context>

<pallas_src>
import functools

import jax
import jax.numpy as jnp
from jax.experimental import pallas as pl
from jax.experimental.pallas import tpu as pltpu


def _ce_label_smooth_kernel(logits_ref, targets_ref, loss_ref, *,
                            epsilon, num_classes):
    # logits_ref: (TB, C) native dtype; targets_ref: (TB, 1) int32
    x = logits_ref[...].astype(jnp.float32)            # (TB, C)
    tb, c = x.shape

    # Numerically stable pieces of log_softmax, reduced to per-row scalars.
    m = jnp.max(x, axis=1, keepdims=True)               # (TB, 1)  XLU
    z = x - m                                            # (TB, C)  VPU
    lse = jnp.log(jnp.sum(jnp.exp(z), axis=1))           # (TB,)    EUP + XLU
    zsum = jnp.sum(z, axis=1)                             # (TB,)    XLU

    # Extract z at the target class via a masked row-reduce.
    t = targets_ref[...]                                  # (TB, 1) int32
    class_ids = jax.lax.broadcasted_iota(jnp.int32, (tb, c), 1)
    z_t = jnp.sum(jnp.where(class_ids == t, z, 0.0), axis=1)  # (TB,)

    # loss_i = lse_i - (1-eps)*z_{i,t_i} - (eps/C)*sum_j z_ij
    loss = lse - (1.0 - epsilon) * z_t - (epsilon / num_classes) * zsum

    # Lane-dense store: batch along the lane axis.
    loss_ref[...] = loss[None, :]                          # (1, TB)


def _pick_tile_b(batch, num_classes, itemsize,
                 max_block_bytes=16 * 1024 * 1024, max_tb=1024):
    """Largest TB (multiple of 8) whose double-buffered logits block fits budget."""
    tb = max_tb
    while tb > 8 and 2 * tb * num_classes * itemsize > max_block_bytes:
        tb //= 2
    b_rounded = -(-batch // 8) * 8
    return min(tb, b_rounded)


def cross_entropy_label_smooth(logits, targets, num_classes,
                               epsilon=0.1, size_average=True, tile_b=None):
    B, C = logits.shape
    assert C == num_classes

    itemsize = jnp.dtype(logits.dtype).itemsize
    TB = int(tile_b) if tile_b is not None else _pick_tile_b(B, C, itemsize)
    num_tiles = -(-B // TB)
    Bp = num_tiles * TB

    # Pad batch so every tile is full; padded rows are sliced off below, so
    # their (finite) losses never contribute to either output variant.
    if Bp != B:
        logits = jnp.pad(logits, ((0, Bp - B), (0, 0)))
        targets = jnp.pad(targets, (0, Bp - B))
    targets2d = targets.astype(jnp.int32).reshape(Bp, 1)

    kernel = functools.partial(
        _ce_label_smooth_kernel,
        epsilon=float(epsilon),
        num_classes=int(num_classes),
    )

    per_sample = pl.pallas_call(
        kernel,
        out_shape=jax.ShapeDtypeStruct((num_tiles, TB), jnp.float32),
        grid=(num_tiles,),
        in_specs=[
            pl.BlockSpec((TB, C), lambda i: (i, 0)),   # logits tile (native dtype)
            pl.BlockSpec((TB, 1), lambda i: (i, 0)),   # integer targets tile
        ],
        out_specs=pl.BlockSpec((1, TB), lambda i: (i, 0)),  # lane-dense losses
        compiler_params=pltpu.CompilerParams(
            dimension_semantics=("parallel",),
            vmem_limit_bytes=32 * 1024 * 1024,
        ),
    )(logits, targets2d)

    per_sample = per_sample.reshape(-1)[:B]            # (B,)
    if size_average:
        # (-t * lp).mean(0).sum() == sum_i loss_i / B
        return jnp.sum(per_sample) / B
    return per_sample


def _reference(logits, targets, num_classes, epsilon=0.1, size_average=True):
    log_probs = jax.nn.log_softmax(logits.astype(jnp.float32), axis=1)
    onehot = jax.nn.one_hot(targets, num_classes, dtype=jnp.float32)
    smooth = (1.0 - epsilon) * onehot + epsilon / num_classes
    if size_average:
        return jnp.sum(jnp.mean(-smooth * log_probs, axis=0))
    return jnp.sum(-smooth * log_probs, axis=1)


if __name__ == "__main__":
    key = jax.random.PRNGKey(0)

    # --- Case 1: small, single tile, both reduction modes -------------------
    B, NUM_CLASSES = 8, 16
    k1, k2 = jax.random.split(key)
    logits = jax.random.normal(k1, (B, NUM_CLASSES), dtype=jnp.float32)
    targets = jax.random.randint(k2, (B,), 0, NUM_CLASSES, dtype=jnp.int32)

    loss = cross_entropy_label_smooth(logits, targets, NUM_CLASSES,
                                      epsilon=0.1, size_average=True)
    loss = jax.block_until_ready(loss)
    ref = _reference(logits, targets, NUM_CLASSES, epsilon=0.1,
                     size_average=True)
    assert jnp.allclose(loss, ref, rtol=1e-5, atol=1e-5), (loss, ref)

    loss_vec = cross_entropy_label_smooth(logits, targets, NUM_CLASSES,
                                          epsilon=0.1, size_average=False)
    loss_vec = jax.block_until_ready(loss_vec)
    ref_vec = _reference(logits, targets, NUM_CLASSES, epsilon=0.1,
                         size_average=False)
    assert jnp.allclose(loss_vec, ref_vec, rtol=1e-5, atol=1e-5)

    # --- Case 2: multi-tile grid with batch padding (B not multiple of TB) --
    B2, NUM_CLASSES2 = 12, 32
    k3, k4 = jax.random.split(k2)
    logits2 = jax.random.normal(k3, (B2, NUM_CLASSES2), dtype=jnp.bfloat16)
    targets2 = jax.random.randint(k4, (B2,), 0, NUM_CLASSES2, dtype=jnp.int32)

    loss2 = cross_entropy_label_smooth(logits2, targets2, NUM_CLASSES2,
                                       epsilon=0.1, size_average=True,
                                       tile_b=8)
    loss2 = jax.block_until_ready(loss2)
    ref2 = _reference(logits2, targets2, NUM_CLASSES2, epsilon=0.1,
                      size_average=True)
    assert jnp.allclose(loss2, ref2, rtol=2e-2, atol=2e-2), (loss2, ref2)

    loss2_vec = cross_entropy_label_smooth(logits2, targets2, NUM_CLASSES2,
                                           epsilon=0.1, size_average=False,
                                           tile_b=8)
    loss2_vec = jax.block_until_ready(loss2_vec)
    ref2_vec = _reference(logits2, targets2, NUM_CLASSES2, epsilon=0.1,
                          size_average=False)
    assert jnp.allclose(loss2_vec, ref2_vec, rtol=2e-2, atol=2e-2)

    print("KERNEL_OK")
</pallas_src>

<mosaic_0001>
module attributes {stable_mosaic.version = 11 : i64} {
  func.func @_ce_label_smooth_kernel(%arg0: i32, %arg1: memref<8x16xf32, #tpu.memory_space<vmem>>, %arg2: memref<8x1xi32, #tpu.memory_space<vmem>>, %arg3: memref<1x8xf32, #tpu.memory_space<vmem>>) attributes {dimension_semantics = [#tpu.dimension_semantics<parallel>], iteration_bounds = array<i64: 1>, scalar_prefetch = 0 : i64, scratch_operands = 0 : i64, tpu.core_type = #tpu.core_type<tc>, window_params = [{transform_indices = @transform_0, window_bounds = array<i64: 8, 16>}, {transform_indices = @transform_1, window_bounds = array<i64: 8, 1>}, {transform_indices = @transform_2, window_bounds = array<i64: 1, 8>}]} {
    %c0 = arith.constant 0 : index
    %c0_0 = arith.constant 0 : index
    %0 = vector.load %arg1[%c0, %c0_0] : memref<8x16xf32, #tpu.memory_space<vmem>>, vector<8x16xf32>
    %cst = arith.constant dense<0xFF800000> : vector<8xf32>
    %1 = vector.multi_reduction <maximumf>, %0, %cst [1] : vector<8x16xf32> to vector<8xf32>
    %2 = vector.shape_cast %1 : vector<8xf32> to vector<8x1xf32>
    %3 = vector.broadcast %2 : vector<8x1xf32> to vector<8x16xf32>
    %4 = arith.subf %0, %3 : vector<8x16xf32>
    %5 = math.exp %4 : vector<8x16xf32>
    %cst_1 = arith.constant dense<0.000000e+00> : vector<8xf32>
    %6 = vector.multi_reduction <add>, %5, %cst_1 [1] : vector<8x16xf32> to vector<8xf32>
    %7 = math.log %6 : vector<8xf32>
    %cst_2 = arith.constant dense<0.000000e+00> : vector<8xf32>
    %8 = vector.multi_reduction <add>, %4, %cst_2 [1] : vector<8x16xf32> to vector<8xf32>
    %c0_3 = arith.constant 0 : index
    %c0_4 = arith.constant 0 : index
    %9 = vector.load %arg2[%c0_3, %c0_4] : memref<8x1xi32, #tpu.memory_space<vmem>>, vector<8x1xi32>
    %10 = tpu.iota {dimensions = array<i32: 1>} : vector<8x16xi32>
    %11 = vector.broadcast %9 : vector<8x1xi32> to vector<8x16xi32>
    %12 = arith.cmpi eq, %10, %11 : vector<8x16xi32>
    %cst_5 = arith.constant 0.000000e+00 : f32
    %13 = vector.broadcast %cst_5 : f32 to vector<8x16xf32>
    %14 = arith.select %12, %4, %13 : vector<8x16xi1>, vector<8x16xf32>
    %cst_6 = arith.constant dense<0.000000e+00> : vector<8xf32>
    %15 = vector.multi_reduction <add>, %14, %cst_6 [1] : vector<8x16xf32> to vector<8xf32>
    %cst_7 = arith.constant 0.899999976 : f32
    %16 = vector.broadcast %cst_7 : f32 to vector<8xf32>
    %17 = arith.mulf %16, %15 : vector<8xf32>
    %18 = arith.subf %7, %17 : vector<8xf32>
    %cst_8 = arith.constant 6.250000e-03 : f32
    %19 = vector.broadcast %cst_8 : f32 to vector<8xf32>
    %20 = arith.mulf %19, %8 : vector<8xf32>
    %21 = arith.subf %18, %20 : vector<8xf32>
    %22 = vector.shape_cast %21 : vector<8xf32> to vector<1x8xf32>
    %c0_9 = arith.constant 0 : index
    %c0_10 = arith.constant 0 : index
    %23 = vector.load %arg3[%c0_9, %c0_10] : memref<1x8xf32, #tpu.memory_space<vmem>>, vector<1x8xf32>
    tpu.vector_store %arg3[%c0_9, %c0_10], %22 {strides = array<i32>} : memref<1x8xf32, #tpu.memory_space<vmem>>, vector<1x8xf32>,
    return
  }
  func.func @transform_0(%arg0: i32) -> (i32, i32) {
    %c0_i32 = arith.constant 0 : i32
    %c0_i32_0 = arith.constant 0 : i32
    return %arg0, %c0_i32 : i32, i32
  }
  func.func @transform_1(%arg0: i32) -> (i32, i32) {
    %c0_i32 = arith.constant 0 : i32
    %c0_i32_0 = arith.constant 0 : i32
    return %arg0, %c0_i32 : i32, i32
  }
  func.func @transform_2(%arg0: i32) -> (i32, i32) {
    %c0_i32 = arith.constant 0 : i32
    %c0_i32_0 = arith.constant 0 : i32
    return %arg0, %c0_i32 : i32, i32
  }
}

</mosaic_0001>

<llo_original>
// kernel: tpu_custom_call.1
$region0: #{tpu_custom_call.1}
  #allocation0 [shape = 'u32[]', space=smem, size = 0x4, offset = 0x4, fixed_abs, tag = 'smem constant byte address 0x4 - core index']
  #allocation1 [shape = 'u32[144,128]{1,0:T(1,128)}', space=vmem, size = 0x12000, scoped, tag = 'internal scratch']
  %s0 = inlined_call_operand.vmem [shape: f32[8,16], index: 0, kind: input, shape index: {}]
  %s1 = inlined_call_operand.vmem [shape: s32[8,1], index: 1, kind: input, shape index: {}]
  %s2 = inlined_call_operand.hbm [shape: f32[1,8], index: 2, kind: output, shape index: {}]
  %s3 = sld [smem:[#allocation0]]
  $region18: #{tpu_custom_call.1} parent=0
    _
  %s5 = ssub.s32 1, %s3
  %s6 = scalar_select 0, %s5, %s3
  $region1: #{tpu_custom_call.1} parent=0
    #allocation2 [shape = 'u8[512]{0}', space=vmem, size = 0x400, scoped, tag = 'output window, operand 0, single buffered']
    #allocation3 [shape = 's32[1]{0}', space=sflag, size = 0x4, scoped, tag = 'scoped memory for tpu_custom_call.1']
    %7 = vsyncpa [#allocation3], 0
    // Predicated region
    $region2: #{tpu_custom_call.1} parent=1 // pred_check
      _
    $region3: #{tpu_custom_call.1} parent=1 // pred_check_branch
      %9 = sbr.rel (0) target = $region5
    $region4: #{tpu_custom_call.1} parent=1 // pred_region
      _
    $region5: #{tpu_custom_call.1} parent=1 // pred_fallthru
      _
    // Predicated region
    $region6: #{tpu_custom_call.1} parent=1 // pred_check
      _
    $region7: #{tpu_custom_call.1} parent=1 // pred_check_branch
      %11 = sbr.rel (0) target = $region9
    $region8: #{tpu_custom_call.1} parent=1 // pred_region
      _
    $region9: #{tpu_custom_call.1} parent=1 // pred_fallthru
      _
    %v12 = vld [vmem:[%s0] sm:$0xff]
    %vm13 = vcmask 130048
    %v14 = vsel %vm13, %v12, -inf
    %15 = vmax.xlane.f32.xlu0 %v14
    %v16 = vpop.xlane.xlu0 %15
    %v17 = vsub.f32 %v12, %v16
    %v18 = vmul.f32 %v17, 1.442695
    %v19 = vpow.pop %v18
    %v20 = vsel %vm13, %v19, 0.0
    %21 = vadd.xlane.f32.xlu0 %v20
    %v22 = vpop.xlane.xlu0 %21
    %v23 = vlog2.pop %v22
    %v24 = vmul.f32 %v23, 0.6931472
    %v25 = vsel %vm13, %v17, 0.0
    %26 = vadd.xlane.f32.xlu0 %v25
    %v27 = vpop.xlane.xlu0 %26
    %v28 = vld [vmem:[%s1] sm:$0xff]
    %v29 = vlaneseq
    %v30 = vand.u32 %v29, 127
    %31 = vset.pattern.permute.xlu0 0
    %32 = vperm.xlu0 %31, %v28
    %v33 = vpop.permute.xlu0 %32
    %vm34 = vcmp.eq.s32.totalorder %v30, %v33
    %v35 = vsel %vm34, %v17, 0.0
    %v36 = vsel %vm13, %v35, 0.0
    %37 = vadd.xlane.f32.xlu0 %v36
    %v38 = vpop.xlane.xlu0 %37
    %v39 = vmul.f32 %v38, 0.9
    %v40 = vsub.f32 %v24, %v39
    %v41 = vmul.f32 %v27, 0.00625
    %v42 = vsub.f32 %v40, %v41
    %v44 = vlaneseq
    %v45 = vshrl.u32 %v44, 7
    %v46 = vsub.s32 %v30, %v45
    %v47 = vrot.slane %v42, %v46
    %vm49 = vcmask 57344
    %50 = vst.msk [vmem:[#allocation2] sm:$0x1] %vm49, %v47
    // Predicated region
    $region10: #{tpu_custom_call.1} parent=1 // pred_check
      _
    $region11: #{tpu_custom_call.1} parent=1 // pred_check_branch
      %52 = sbr.rel (0) target = $region13
    $region12: #{tpu_custom_call.1} parent=1 // pred_region
      %s54 = ssub.s32 16, 16
      %55 = vsyncadd [#allocation3], %s54
      %s57 = sshll.u32 [#allocation2], 4
      %s58 = int_to_ptr.vmem [resolvable:$true] %s57
      %60 = dma.vmem_to_hbm [thread:$0]  %s58, 16, %s2, [#allocation3]
    $region13: #{tpu_custom_call.1} parent=1 // pred_fallthru
      _
    // Predicated region
    $region14: #{tpu_custom_call.1} parent=1 // pred_check
      _
    $region15: #{tpu_custom_call.1} parent=1 // pred_check_branch
      %62 = sbr.rel (0) target = $region17
    $region16: #{tpu_custom_call.1} parent=1 // pred_region
      %63 = dma.done [#allocation3], 16
    $region17: #{tpu_custom_call.1} parent=1 // pred_fallthru
      _
    %64 = vsyncpa [#allocation3], 1

</llo_original>
